<compile_context>
chip_gen: v7x
topology: tpu7x:2x2x1
jax: 0.10.0
libtpu: 0.0.40
codegen_flags: <defaults>
</compile_context>

<pallas_src>
import functools

import numpy as np
import jax
import jax.numpy as jnp
from jax.experimental import pallas as pl
from jax.experimental.pallas import tpu as pltpu


# ----------------------------- in-kernel helpers -----------------------------

def _erf_poly(x):
    # Abramowitz & Stegun 7.1.26 polynomial approximation, |error| <= 1.5e-7.
    # Uses only exp / mul / add / where, all of which lower cleanly in Mosaic.
    a1, a2, a3, a4, a5 = (0.254829592, -0.284496736, 1.421413741,
                          -1.453152027, 1.061405429)
    p = 0.3275911
    ax = jnp.abs(x)
    t = 1.0 / (1.0 + p * ax)
    poly = ((((a5 * t + a4) * t + a3) * t + a2) * t + a1) * t
    e = 1.0 - poly * jnp.exp(-ax * ax)
    return jnp.where(x >= 0, e, -e)


def _gelu_exact(x):
    # Exact GELU (matches PyTorch nn.GELU() default, erf-based).
    return 0.5 * x * (1.0 + _erf_poly(x * (1.0 / np.sqrt(2.0))))


def _layernorm(x, gamma, beta, eps=1e-5):
    mu = jnp.mean(x, axis=-1, keepdims=True)
    var = jnp.mean((x - mu) * (x - mu), axis=-1, keepdims=True)
    return (x - mu) * jax.lax.rsqrt(var + eps) * gamma + beta


# --------------------------------- kernel ------------------------------------

def _ffn_pseudoformer_kernel(x_ref, z_ref,
                             g1_ref, be1_ref, g2_ref, be2_ref,
                             w1_ref, b1_ref, w2_ref, b2_ref,
                             o_ref):
    x = x_ref[...].astype(jnp.float32)          # (tm, D)
    z = z_ref[...].astype(jnp.float32)

    # z1 = LayerNorm1(x + dropout(z))   (dropout identity at inference)
    z1 = _layernorm(x + z, g1_ref[...], be1_ref[...])

    # Wffn: Linear(D -> 4D) -> GELU -> Dropout(identity) -> Linear(4D -> D)
    h = jnp.dot(z1, w1_ref[...], preferred_element_type=jnp.float32) + b1_ref[...]
    h = _gelu_exact(h)
    ffn = jnp.dot(h, w2_ref[...], preferred_element_type=jnp.float32) + b2_ref[...]

    # out = LayerNorm2(z1 + dropout(ffn))
    out = _layernorm(z1 + ffn, g2_ref[...], be2_ref[...])
    o_ref[...] = out.astype(o_ref.dtype)


# --------------------------------- wrapper -----------------------------------

def _round_up(n, m):
    return ((n + m - 1) // m) * m


@functools.partial(jax.jit, static_argnames=("block_m",))
def ffn_pseudoformer(x, z, params, *, block_m=256):
    """FFN_Pseudoformer.forward(x, z) at eval time.  x, z: (B, L, D)."""
    B, L, D = x.shape
    H = params["w1"].shape[1]                   # 4 * D
    M = B * L
    x2 = x.reshape(M, D)
    z2 = z.reshape(M, D)

    # Row tile: multiple of 8 sublanes, capped at block_m; pad M up to a
    # multiple of the tile (padded rows are independent and sliced off).
    tm = min(block_m, _round_up(M, 8))
    Mp = _round_up(M, tm)
    if Mp != M:
        pad = Mp - M
        x2 = jnp.pad(x2, ((0, pad), (0, 0)))
        z2 = jnp.pad(z2, ((0, pad), (0, 0)))

    grid = (Mp // tm,)
    row_spec = pl.BlockSpec((tm, D), lambda i: (i, 0))

    def const_spec(shape):
        return pl.BlockSpec(shape, lambda i: (0,) * len(shape))

    in_specs = [
        row_spec, row_spec,                                  # x, z
        const_spec(params["ln1_g"].shape), const_spec(params["ln1_b"].shape),
        const_spec(params["ln2_g"].shape), const_spec(params["ln2_b"].shape),
        const_spec(params["w1"].shape), const_spec(params["b1"].shape),
        const_spec(params["w2"].shape), const_spec(params["b2"].shape),
    ]

    flops = 2 * Mp * D * H * 2 + 12 * Mp * D + 10 * Mp * H
    bytes_accessed = 4 * (3 * Mp * D + 2 * D * H + 2 * H + 6 * D)
    cost = pl.CostEstimate(flops=flops, transcendentals=Mp * H,
                           bytes_accessed=bytes_accessed)

    out = pl.pallas_call(
        _ffn_pseudoformer_kernel,
        out_shape=jax.ShapeDtypeStruct((Mp, D), x.dtype),
        grid=grid,
        in_specs=in_specs,
        out_specs=row_spec,
        compiler_params=pltpu.CompilerParams(
            dimension_semantics=("parallel",)),
        cost_estimate=cost,
    )(x2, z2,
      params["ln1_g"], params["ln1_b"],
      params["ln2_g"], params["ln2_b"],
      params["w1"], params["b1"], params["w2"], params["b2"])

    return out[:M].reshape(B, L, D)


# ------------------------ parameter construction -----------------------------

def make_params(key, fea_size):
    def linear(k, fan_in, fan_out):
        kw, kb = jax.random.split(k)
        bound = 1.0 / np.sqrt(fan_in)
        w = jax.random.uniform(kw, (fan_in, fan_out), jnp.float32, -bound, bound)
        b = jax.random.uniform(kb, (1, fan_out), jnp.float32, -bound, bound)
        return w, b

    k1, k2, k3, k4, k5, k6 = jax.random.split(key, 6)
    w1, b1 = linear(k1, fea_size, fea_size * 4)
    w2, b2 = linear(k2, fea_size * 4, fea_size)
    # LayerNorm params (randomized slightly so the gamma/beta path is exercised).
    ln1_g = 1.0 + 0.1 * jax.random.normal(k3, (1, fea_size), jnp.float32)
    ln1_b = 0.1 * jax.random.normal(k4, (1, fea_size), jnp.float32)
    ln2_g = 1.0 + 0.1 * jax.random.normal(k5, (1, fea_size), jnp.float32)
    ln2_b = 0.1 * jax.random.normal(k6, (1, fea_size), jnp.float32)
    return dict(w1=w1, b1=b1, w2=w2, b2=b2,
                ln1_g=ln1_g, ln1_b=ln1_b, ln2_g=ln2_g, ln2_b=ln2_b)


# ---------------------- pure-JAX reference (correctness) ---------------------

def _ref_ffn_pseudoformer(x, z, p):
    def ln(v, g, b, eps=1e-5):
        mu = v.mean(-1, keepdims=True)
        var = ((v - mu) ** 2).mean(-1, keepdims=True)
        return (v - mu) / jnp.sqrt(var + eps) * g + b

    z1 = ln(x + z, p["ln1_g"], p["ln1_b"])
    h = z1 @ p["w1"] + p["b1"]
    h = 0.5 * h * (1.0 + jax.scipy.special.erf(h / np.sqrt(2.0)))   # exact GELU
    ffn = h @ p["w2"] + p["b2"]
    return ln(z1 + ffn, p["ln2_g"], p["ln2_b"])


# ----------------------------------------------------------------------------

if __name__ == "__main__":
    # Small config: batch=2, seq=8, feaSize=32 (hidden of Wffn = 4*32 = 128).
    B, L, D = 2, 8, 32

    root = jax.random.PRNGKey(0)
    kx, kz, kp = jax.random.split(root, 3)
    x = jax.random.normal(kx, (B, L, D), jnp.float32)
    z = jax.random.normal(kz, (B, L, D), jnp.float32)
    params = make_params(kp, D)

    out = jax.block_until_ready(ffn_pseudoformer(x, z, params))
    ref = _ref_ffn_pseudoformer(x, z, params)

    np.testing.assert_allclose(np.asarray(out), np.asarray(ref),
                               rtol=1e-4, atol=1e-4)
    print("KERNEL_OK")
</pallas_src>

<mosaic_0001>
module attributes {stable_mosaic.version = 11 : i64} {
  func.func @_ffn_pseudoformer_kernel(%arg0: i32, %arg1: memref<16x32xf32, #tpu.memory_space<vmem>>, %arg2: memref<16x32xf32, #tpu.memory_space<vmem>>, %arg3: memref<1x32xf32, #tpu.memory_space<vmem>>, %arg4: memref<1x32xf32, #tpu.memory_space<vmem>>, %arg5: memref<1x32xf32, #tpu.memory_space<vmem>>, %arg6: memref<1x32xf32, #tpu.memory_space<vmem>>, %arg7: memref<32x128xf32, #tpu.memory_space<vmem>>, %arg8: memref<1x128xf32, #tpu.memory_space<vmem>>, %arg9: memref<128x32xf32, #tpu.memory_space<vmem>>, %arg10: memref<1x32xf32, #tpu.memory_space<vmem>>, %arg11: memref<16x32xf32, #tpu.memory_space<vmem>>) attributes {dimension_semantics = [#tpu.dimension_semantics<parallel>], iteration_bounds = array<i64: 1>, scalar_prefetch = 0 : i64, scratch_operands = 0 : i64, tpu.core_type = #tpu.core_type<tc>, window_params = [{transform_indices = @transform_0, window_bounds = array<i64: 16, 32>}, {transform_indices = @transform_1, window_bounds = array<i64: 16, 32>}, {pipeline_mode = #tpu.pipeline_mode<synchronous>, transform_indices = @transform_2, window_bounds = array<i64: 1, 32>}, {pipeline_mode = #tpu.pipeline_mode<synchronous>, transform_indices = @transform_3, window_bounds = array<i64: 1, 32>}, {pipeline_mode = #tpu.pipeline_mode<synchronous>, transform_indices = @transform_4, window_bounds = array<i64: 1, 32>}, {pipeline_mode = #tpu.pipeline_mode<synchronous>, transform_indices = @transform_5, window_bounds = array<i64: 1, 32>}, {pipeline_mode = #tpu.pipeline_mode<synchronous>, transform_indices = @transform_6, window_bounds = array<i64: 32, 128>}, {pipeline_mode = #tpu.pipeline_mode<synchronous>, transform_indices = @transform_7, window_bounds = array<i64: 1, 128>}, {pipeline_mode = #tpu.pipeline_mode<synchronous>, transform_indices = @transform_8, window_bounds = array<i64: 128, 32>}, {pipeline_mode = #tpu.pipeline_mode<synchronous>, transform_indices = @transform_9, window_bounds = array<i64: 1, 32>}, {transform_indices = @transform_10, window_bounds = array<i64: 16, 32>}]} {
    %c0 = arith.constant 0 : index
    %c0_0 = arith.constant 0 : index
    %0 = vector.load %arg1[%c0, %c0_0] : memref<16x32xf32, #tpu.memory_space<vmem>>, vector<16x32xf32>
    %c0_1 = arith.constant 0 : index
    %c0_2 = arith.constant 0 : index
    %1 = vector.load %arg2[%c0_1, %c0_2] : memref<16x32xf32, #tpu.memory_space<vmem>>, vector<16x32xf32>
    %2 = arith.addf %0, %1 : vector<16x32xf32>
    %c0_3 = arith.constant 0 : index
    %c0_4 = arith.constant 0 : index
    %3 = vector.load %arg3[%c0_3, %c0_4] : memref<1x32xf32, #tpu.memory_space<vmem>>, vector<1x32xf32>
    %c0_5 = arith.constant 0 : index
    %c0_6 = arith.constant 0 : index
    %4 = vector.load %arg4[%c0_5, %c0_6] : memref<1x32xf32, #tpu.memory_space<vmem>>, vector<1x32xf32>
    %cst = arith.constant dense<0.000000e+00> : vector<16xf32>
    %5 = vector.multi_reduction <add>, %2, %cst [1] : vector<16x32xf32> to vector<16xf32>
    %6 = vector.shape_cast %5 : vector<16xf32> to vector<16x1xf32>
    %cst_7 = arith.constant 3.200000e+01 : f32
    %7 = vector.broadcast %cst_7 : f32 to vector<16x1xf32>
    %8 = arith.divf %6, %7 : vector<16x1xf32>
    %9 = vector.broadcast %8 : vector<16x1xf32> to vector<16x32xf32>
    %10 = arith.subf %2, %9 : vector<16x32xf32>
    %11 = vector.broadcast %8 : vector<16x1xf32> to vector<16x32xf32>
    %12 = arith.subf %2, %11 : vector<16x32xf32>
    %13 = arith.mulf %10, %12 : vector<16x32xf32>
    %cst_8 = arith.constant dense<0.000000e+00> : vector<16xf32>
    %14 = vector.multi_reduction <add>, %13, %cst_8 [1] : vector<16x32xf32> to vector<16xf32>
    %15 = vector.shape_cast %14 : vector<16xf32> to vector<16x1xf32>
    %cst_9 = arith.constant 3.200000e+01 : f32
    %16 = vector.broadcast %cst_9 : f32 to vector<16x1xf32>
    %17 = arith.divf %15, %16 : vector<16x1xf32>
    %18 = vector.broadcast %8 : vector<16x1xf32> to vector<16x32xf32>
    %19 = arith.subf %2, %18 : vector<16x32xf32>
    %cst_10 = arith.constant 9.99999974E-6 : f32
    %20 = vector.broadcast %cst_10 : f32 to vector<16x1xf32>
    %21 = arith.addf %17, %20 : vector<16x1xf32>
    %22 = math.rsqrt %21 : vector<16x1xf32>
    %23 = vector.broadcast %22 : vector<16x1xf32> to vector<16x32xf32>
    %24 = arith.mulf %19, %23 : vector<16x32xf32>
    %25 = vector.broadcast %3 : vector<1x32xf32> to vector<16x32xf32>
    %26 = arith.mulf %24, %25 : vector<16x32xf32>
    %27 = vector.broadcast %4 : vector<1x32xf32> to vector<16x32xf32>
    %28 = arith.addf %26, %27 : vector<16x32xf32>
    %c0_11 = arith.constant 0 : index
    %c0_12 = arith.constant 0 : index
    %29 = vector.load %arg7[%c0_11, %c0_12] : memref<32x128xf32, #tpu.memory_space<vmem>>, vector<32x128xf32>
    %cst_13 = arith.constant dense<0.000000e+00> : vector<16x128xf32>
    %30 = tpu.matmul %28, %29, %cst_13 {dimension_numbers = #tpu.dot_dimension_numbers<[1], [0], [0], [1], [0, 0, 1, 1], [], []>} : vector<16x32xf32>, vector<32x128xf32>, vector<16x128xf32> -> vector<16x128xf32>
    %c0_14 = arith.constant 0 : index
    %c0_15 = arith.constant 0 : index
    %31 = vector.load %arg8[%c0_14, %c0_15] : memref<1x128xf32, #tpu.memory_space<vmem>>, vector<1x128xf32>
    %32 = vector.broadcast %31 : vector<1x128xf32> to vector<16x128xf32>
    %33 = arith.addf %30, %32 : vector<16x128xf32>
    %cst_16 = arith.constant 5.000000e-01 : f32
    %34 = vector.broadcast %cst_16 : f32 to vector<16x128xf32>
    %35 = arith.mulf %34, %33 : vector<16x128xf32>
    %cst_17 = arith.constant 0.707106769 : f32
    %36 = vector.broadcast %cst_17 : f32 to vector<16x128xf32>
    %37 = arith.mulf %33, %36 : vector<16x128xf32>
    %38 = math.absf %37 : vector<16x128xf32>
    %cst_18 = arith.constant 0.327591091 : f32
    %39 = vector.broadcast %cst_18 : f32 to vector<16x128xf32>
    %40 = arith.mulf %39, %38 : vector<16x128xf32>
    %cst_19 = arith.constant 1.000000e+00 : f32
    %41 = vector.broadcast %cst_19 : f32 to vector<16x128xf32>
    %42 = arith.addf %41, %40 : vector<16x128xf32>
    %cst_20 = arith.constant 1.000000e+00 : f32
    %43 = vector.broadcast %cst_20 : f32 to vector<16x128xf32>
    %44 = arith.divf %43, %42 : vector<16x128xf32>
    %cst_21 = arith.constant 1.06140542 : f32
    %45 = vector.broadcast %cst_21 : f32 to vector<16x128xf32>
    %46 = arith.mulf %45, %44 : vector<16x128xf32>
    %cst_22 = arith.constant -1.45315206 : f32
    %47 = vector.broadcast %cst_22 : f32 to vector<16x128xf32>
    %48 = arith.addf %46, %47 : vector<16x128xf32>
    %49 = arith.mulf %48, %44 : vector<16x128xf32>
    %cst_23 = arith.constant 1.42141378 : f32
    %50 = vector.broadcast %cst_23 : f32 to vector<16x128xf32>
    %51 = arith.addf %49, %50 : vector<16x128xf32>
    %52 = arith.mulf %51, %44 : vector<16x128xf32>
    %cst_24 = arith.constant -0.284496725 : f32
    %53 = vector.broadcast %cst_24 : f32 to vector<16x128xf32>
    %54 = arith.addf %52, %53 : vector<16x128xf32>
    %55 = arith.mulf %54, %44 : vector<16x128xf32>
    %cst_25 = arith.constant 0.254829586 : f32
    %56 = vector.broadcast %cst_25 : f32 to vector<16x128xf32>
    %57 = arith.addf %55, %56 : vector<16x128xf32>
    %58 = arith.mulf %57, %44 : vector<16x128xf32>
    %cst_26 = arith.constant 0.000000e+00 : f32
    %59 = vector.broadcast %cst_26 : f32 to vector<16x128xf32>
    %60 = arith.subf %59, %38 : vector<16x128xf32>
    %61 = arith.mulf %60, %38 : vector<16x128xf32>
    %62 = math.exp %61 : vector<16x128xf32>
    %63 = arith.mulf %58, %62 : vector<16x128xf32>
    %cst_27 = arith.constant 1.000000e+00 : f32
    %64 = vector.broadcast %cst_27 : f32 to vector<16x128xf32>
    %65 = arith.subf %64, %63 : vector<16x128xf32>
    %cst_28 = arith.constant 0.000000e+00 : f32
    %66 = vector.broadcast %cst_28 : f32 to vector<16x128xf32>
    %67 = arith.cmpf oge, %37, %66 : vector<16x128xf32>
    %cst_29 = arith.constant 0.000000e+00 : f32
    %68 = vector.broadcast %cst_29 : f32 to vector<16x128xf32>
    %69 = arith.subf %68, %65 : vector<16x128xf32>
    %70 = arith.select %67, %65, %69 : vector<16x128xi1>, vector<16x128xf32>
    %cst_30 = arith.constant 1.000000e+00 : f32
    %71 = vector.broadcast %cst_30 : f32 to vector<16x128xf32>
    %72 = arith.addf %71, %70 : vector<16x128xf32>
    %73 = arith.mulf %35, %72 : vector<16x128xf32>
    %c0_31 = arith.constant 0 : index
    %c0_32 = arith.constant 0 : index
    %74 = vector.load %arg9[%c0_31, %c0_32] : memref<128x32xf32, #tpu.memory_space<vmem>>, vector<128x32xf32>
    %cst_33 = arith.constant dense<0.000000e+00> : vector<16x32xf32>
    %75 = tpu.matmul %73, %74, %cst_33 {dimension_numbers = #tpu.dot_dimension_numbers<[1], [0], [0], [1], [0, 0, 1, 1], [], []>} : vector<16x128xf32>, vector<128x32xf32>, vector<16x32xf32> -> vector<16x32xf32>
    %c0_34 = arith.constant 0 : index
    %c0_35 = arith.constant 0 : index
    %76 = vector.load %arg10[%c0_34, %c0_35] : memref<1x32xf32, #tpu.memory_space<vmem>>, vector<1x32xf32>
    %77 = vector.broadcast %76 : vector<1x32xf32> to vector<16x32xf32>
    %78 = arith.addf %75, %77 : vector<16x32xf32>
    %79 = arith.addf %28, %78 : vector<16x32xf32>
    %c0_36 = arith.constant 0 : index
    %c0_37 = arith.constant 0 : index
    %80 = vector.load %arg5[%c0_36, %c0_37] : memref<1x32xf32, #tpu.memory_space<vmem>>, vector<1x32xf32>
    %c0_38 = arith.constant 0 : index
    %c0_39 = arith.constant 0 : index
    %81 = vector.load %arg6[%c0_38, %c0_39] : memref<1x32xf32, #tpu.memory_space<vmem>>, vector<1x32xf32>
    %cst_40 = arith.constant dense<0.000000e+00> : vector<16xf32>
    %82 = vector.multi_reduction <add>, %79, %cst_40 [1] : vector<16x32xf32> to vector<16xf32>
    %83 = vector.shape_cast %82 : vector<16xf32> to vector<16x1xf32>
    %cst_41 = arith.constant 3.200000e+01 : f32
    %84 = vector.broadcast %cst_41 : f32 to vector<16x1xf32>
    %85 = arith.divf %83, %84 : vector<16x1xf32>
    %86 = vector.broadcast %85 : vector<16x1xf32> to vector<16x32xf32>
    %87 = arith.subf %79, %86 : vector<16x32xf32>
    %88 = vector.broadcast %85 : vector<16x1xf32> to vector<16x32xf32>
    %89 = arith.subf %79, %88 : vector<16x32xf32>
    %90 = arith.mulf %87, %89 : vector<16x32xf32>
    %cst_42 = arith.constant dense<0.000000e+00> : vector<16xf32>
    %91 = vector.multi_reduction <add>, %90, %cst_42 [1] : vector<16x32xf32> to vector<16xf32>
    %92 = vector.shape_cast %91 : vector<16xf32> to vector<16x1xf32>
    %cst_43 = arith.constant 3.200000e+01 : f32
    %93 = vector.broadcast %cst_43 : f32 to vector<16x1xf32>
    %94 = arith.divf %92, %93 : vector<16x1xf32>
    %95 = vector.broadcast %85 : vector<16x1xf32> to vector<16x32xf32>
    %96 = arith.subf %79, %95 : vector<16x32xf32>
    %cst_44 = arith.constant 9.99999974E-6 : f32
    %97 = vector.broadcast %cst_44 : f32 to vector<16x1xf32>
    %98 = arith.addf %94, %97 : vector<16x1xf32>
    %99 = math.rsqrt %98 : vector<16x1xf32>
    %100 = vector.broadcast %99 : vector<16x1xf32> to vector<16x32xf32>
    %101 = arith.mulf %96, %100 : vector<16x32xf32>
    %102 = vector.broadcast %80 : vector<1x32xf32> to vector<16x32xf32>
    %103 = arith.mulf %101, %102 : vector<16x32xf32>
    %104 = vector.broadcast %81 : vector<1x32xf32> to vector<16x32xf32>
    %105 = arith.addf %103, %104 : vector<16x32xf32>
    %c0_45 = arith.constant 0 : index
    %c0_46 = arith.constant 0 : index
    %106 = vector.load %arg11[%c0_45, %c0_46] : memref<16x32xf32, #tpu.memory_space<vmem>>, vector<16x32xf32>
    tpu.vector_store %arg11[%c0_45, %c0_46], %105 {strides = array<i32>} : memref<16x32xf32, #tpu.memory_space<vmem>>, vector<16x32xf32>,
    return
  }
  func.func @transform_0(%arg0: i32) -> (i32, i32) {
    %c0_i32 = arith.constant 0 : i32
    %c0_i32_0 = arith.constant 0 : i32
    return %arg0, %c0_i32 : i32, i32
  }
  func.func @transform_1(%arg0: i32) -> (i32, i32) {
    %c0_i32 = arith.constant 0 : i32
    %c0_i32_0 = arith.constant 0 : i32
    return %arg0, %c0_i32 : i32, i32
  }
  func.func @transform_2(%arg0: i32) -> (i32, i32) {
    %c0_i32 = arith.constant 0 : i32
    %c0_i32_0 = arith.constant 0 : i32
    %c0_i32_1 = arith.constant 0 : i32
    return %c0_i32, %c0_i32_0 : i32, i32
  }
  func.func @transform_3(%arg0: i32) -> (i32, i32) {
    %c0_i32 = arith.constant 0 : i32
    %c0_i32_0 = arith.constant 0 : i32
    %c0_i32_1 = arith.constant 0 : i32
    return %c0_i32, %c0_i32_0 : i32, i32
  }
  func.func @transform_4(%arg0: i32) -> (i32, i32) {
    %c0_i32 = arith.constant 0 : i32
    %c0_i32_0 = arith.constant 0 : i32
    %c0_i32_1 = arith.constant 0 : i32
    return %c0_i32, %c0_i32_0 : i32, i32
  }
  func.func @transform_5(%arg0: i32) -> (i32, i32) {
    %c0_i32 = arith.constant 0 : i32
    %c0_i32_0 = arith.constant 0 : i32
    %c0_i32_1 = arith.constant 0 : i32
    return %c0_i32, %c0_i32_0 : i32, i32
  }
  func.func @transform_6(%arg0: i32) -> (i32, i32) {
    %c0_i32 = arith.constant 0 : i32
    %c0_i32_0 = arith.constant 0 : i32
    %c0_i32_1 = arith.constant 0 : i32
    return %c0_i32, %c0_i32_0 : i32, i32
  }
  func.func @transform_7(%arg0: i32) -> (i32, i32) {
    %c0_i32 = arith.constant 0 : i32
    %c0_i32_0 = arith.constant 0 : i32
    %c0_i32_1 = arith.constant 0 : i32
    return %c0_i32, %c0_i32_0 : i32, i32
  }
  func.func @transform_8(%arg0: i32) -> (i32, i32) {
    %c0_i32 = arith.constant 0 : i32
    %c0_i32_0 = arith.constant 0 : i32
    %c0_i32_1 = arith.constant 0 : i32
    return %c0_i32, %c0_i32_0 : i32, i32
  }
  func.func @transform_9(%arg0: i32) -> (i32, i32) {
    %c0_i32 = arith.constant 0 : i32
    %c0_i32_0 = arith.constant 0 : i32
    %c0_i32_1 = arith.constant 0 : i32
    return %c0_i32, %c0_i32_0 : i32, i32
  }
  func.func @transform_10(%arg0: i32) -> (i32, i32) {
    %c0_i32 = arith.constant 0 : i32
    %c0_i32_0 = arith.constant 0 : i32
    return %arg0, %c0_i32 : i32, i32
  }
}

</mosaic_0001>

<llo_original>
// kernel: ffn_pseudoformer.1
$region0: #{ffn_pseudoformer.1}
  #allocation0 [shape = 'u32[]', space=smem, size = 0x4, offset = 0x4, fixed_abs, tag = 'smem constant byte address 0x4 - core index']
  #allocation1 [shape = 'u32[144,128]{1,0:T(1,128)}', space=vmem, size = 0x12000, scoped, tag = 'internal scratch']
  %s0 = inlined_call_operand.vmem [shape: f32[16,32], index: 0, kind: input, shape index: {}]
  %s1 = inlined_call_operand.vmem [shape: f32[16,32], index: 1, kind: input, shape index: {}]
  %s2 = inlined_call_operand.vmem [shape: f32[1,32], index: 2, kind: input, shape index: {}]
  %s3 = inlined_call_operand.vmem [shape: f32[1,32], index: 3, kind: input, shape index: {}]
  %s4 = inlined_call_operand.vmem [shape: f32[1,32], index: 4, kind: input, shape index: {}]
  %s5 = inlined_call_operand.vmem [shape: f32[1,32], index: 5, kind: input, shape index: {}]
  %s6 = inlined_call_operand.vmem [shape: f32[32,128], index: 6, kind: input, shape index: {}]
  %s7 = inlined_call_operand.vmem [shape: f32[1,128], index: 7, kind: input, shape index: {}]
  %s8 = inlined_call_operand.vmem [shape: f32[128,32], index: 8, kind: input, shape index: {}]
  %s9 = inlined_call_operand.vmem [shape: f32[1,32], index: 9, kind: input, shape index: {}]
  %s10 = inlined_call_operand.hbm [shape: f32[16,32], index: 10, kind: output, shape index: {}]
  %s11 = sld [smem:[#allocation0]]
  $region50: #{ffn_pseudoformer.1} parent=0
    _
  %s13 = ssub.s32 1, %s11
  %s14 = scalar_select 0, %s13, %s11
  $region1: #{ffn_pseudoformer.1} parent=0
    #allocation2 [shape = 'u8[8192]{0}', space=vmem, size = 0x2000, scoped, tag = 'output window, operand 0, single buffered']
    #allocation3 [shape = 's32[1]{0}', space=sflag, size = 0x4, scoped, tag = 'scoped memory for ffn_pseudoformer.1']
    %15 = vsyncpa [#allocation3], 0
    // Predicated region
    $region2: #{ffn_pseudoformer.1} parent=1 // pred_check
      _
    $region3: #{ffn_pseudoformer.1} parent=1 // pred_check_branch
      %17 = sbr.rel (0) target = $region5
    $region4: #{ffn_pseudoformer.1} parent=1 // pred_region
      _
    $region5: #{ffn_pseudoformer.1} parent=1 // pred_fallthru
      _
    // Predicated region
    $region6: #{ffn_pseudoformer.1} parent=1 // pred_check
      _
    $region7: #{ffn_pseudoformer.1} parent=1 // pred_check_branch
      %19 = sbr.rel (0) target = $region9
    $region8: #{ffn_pseudoformer.1} parent=1 // pred_region
      _
    $region9: #{ffn_pseudoformer.1} parent=1 // pred_fallthru
      _
    // Predicated region
    $region10: #{ffn_pseudoformer.1} parent=1 // pred_check
      _
    $region11: #{ffn_pseudoformer.1} parent=1 // pred_check_branch
      %21 = sbr.rel (0) target = $region13
    $region12: #{ffn_pseudoformer.1} parent=1 // pred_region
      _
    $region13: #{ffn_pseudoformer.1} parent=1 // pred_fallthru
      _
    // Predicated region
    $region14: #{ffn_pseudoformer.1} parent=1 // pred_check
      _
    $region15: #{ffn_pseudoformer.1} parent=1 // pred_check_branch
      %23 = sbr.rel (0) target = $region17
    $region16: #{ffn_pseudoformer.1} parent=1 // pred_region
      _
    $region17: #{ffn_pseudoformer.1} parent=1 // pred_fallthru
      _
    // Predicated region
    $region18: #{ffn_pseudoformer.1} parent=1 // pred_check
      _
    $region19: #{ffn_pseudoformer.1} parent=1 // pred_check_branch
      %25 = sbr.rel (0) target = $region21
    $region20: #{ffn_pseudoformer.1} parent=1 // pred_region
      _
    $region21: #{ffn_pseudoformer.1} parent=1 // pred_fallthru
      _
    // Predicated region
    $region22: #{ffn_pseudoformer.1} parent=1 // pred_check
      _
    $region23: #{ffn_pseudoformer.1} parent=1 // pred_check_branch
      %27 = sbr.rel (0) target = $region25
    $region24: #{ffn_pseudoformer.1} parent=1 // pred_region
      _
    $region25: #{ffn_pseudoformer.1} parent=1 // pred_fallthru
      _
    // Predicated region
    $region26: #{ffn_pseudoformer.1} parent=1 // pred_check
      _
    $region27: #{ffn_pseudoformer.1} parent=1 // pred_check_branch
      %29 = sbr.rel (0) target = $region29
    $region28: #{ffn_pseudoformer.1} parent=1 // pred_region
      _
    $region29: #{ffn_pseudoformer.1} parent=1 // pred_fallthru
      _
    // Predicated region
    $region30: #{ffn_pseudoformer.1} parent=1 // pred_check
      _
    $region31: #{ffn_pseudoformer.1} parent=1 // pred_check_branch
      %31 = sbr.rel (0) target = $region33
    $region32: #{ffn_pseudoformer.1} parent=1 // pred_region
      _
    $region33: #{ffn_pseudoformer.1} parent=1 // pred_fallthru
      _
    // Predicated region
    $region34: #{ffn_pseudoformer.1} parent=1 // pred_check
      _
    $region35: #{ffn_pseudoformer.1} parent=1 // pred_check_branch
      %33 = sbr.rel (0) target = $region37
    $region36: #{ffn_pseudoformer.1} parent=1 // pred_region
      _
    $region37: #{ffn_pseudoformer.1} parent=1 // pred_fallthru
      _
    // Predicated region
    $region38: #{ffn_pseudoformer.1} parent=1 // pred_check
      _
    $region39: #{ffn_pseudoformer.1} parent=1 // pred_check_branch
      %35 = sbr.rel (0) target = $region41
    $region40: #{ffn_pseudoformer.1} parent=1 // pred_region
      _
    $region41: #{ffn_pseudoformer.1} parent=1 // pred_fallthru
      _
    %v36 = vld [vmem:[%s0] sm:$0xff]
    %v37 = vld [vmem:[%s0 + $0x8] sm:$0xff]
    %v38 = vld [vmem:[%s1] sm:$0xff]
    %v39 = vld [vmem:[%s1 + $0x8] sm:$0xff]
    %v40 = vadd.f32 %v36, %v38
    %v41 = vadd.f32 %v37, %v39
    %v42 = vld [vmem:[%s2] sm:$0x1]
    %v43 = vld [vmem:[%s3] sm:$0x1]
    %vm44 = vcmask 261120
    %v45 = vsel %vm44, %v40, 0.0
    %46 = vadd.xlane.f32.xlu0 %v45
    %v47 = vpop.xlane.xlu0 %46
    %v48 = vsel %vm44, %v41, 0.0
    %49 = vadd.xlane.f32.xlu0 %v48
    %v50 = vpop.xlane.xlu0 %49
    %v51 = vrcp.pop 32.0
    %v52 = vmul.f32 %v47, %v51
    %v53 = vmul.f32 %v50, %v51
    %v54 = vsub.f32 %v40, %v52
    %v55 = vsub.f32 %v41, %v53
    %v56 = vmul.f32 %v54, %v54
    %v57 = vmul.f32 %v55, %v55
    %v58 = vsel %vm44, %v56, 0.0
    %59 = vadd.xlane.f32.xlu0 %v58
    %v60 = vpop.xlane.xlu0 %59
    %v61 = vsel %vm44, %v57, 0.0
    %62 = vadd.xlane.f32.xlu0 %v61
    %v63 = vpop.xlane.xlu0 %62
    %v64 = vmul.f32 %v60, %v51
    %v65 = vmul.f32 %v63, %v51
    %v66 = vadd.f32 %v64, 1e-05
    %v67 = vadd.f32 %v65, 1e-05
    %v68 = vrsqrt.pop %v66
    %v69 = vrsqrt.pop %v67
    %v70 = vmul.f32 %v54, %v68
    %v71 = vmul.f32 %v55, %v69
    %v73 = vlaneseq
    %v74 = vshrl.u32 %v73, 7
    %v75 = vsub.s32 0, %v74
    %v76 = vrot.slane %v42, %v75
    %v78 = vmul.f32 %v70, %v76
    %v79 = vmul.f32 %v71, %v76
    %v81 = vlaneseq
    %v82 = vshrl.u32 %v81, 7
    %v83 = vsub.s32 0, %v82
    %v84 = vrot.slane %v43, %v83
    %v86 = vadd.f32 %v78, %v84
    %v87 = vadd.f32 %v79, %v84
    %v88 = vld [vmem:[%s6] sm:$0xff]
    %v89 = vld [vmem:[%s6 + $0x8] sm:$0xff]
    %v90 = vld [vmem:[%s6 + $0x10] sm:$0xff]
    %v91 = vld [vmem:[%s6 + $0x18] sm:$0xff]
    %v92 = vld [vmem:[%s7] sm:$0x1]
    %v94 = vlaneseq
    %v95 = vshrl.u32 %v94, 7
    %v96 = vsub.s32 0, %v95
    %v97 = vrot.slane %v92, %v96
    %v100 = vsel %vm44, %v86, 0
    %v103 = vsel %vm44, %v87, 0
    %105 = vmatprep.subr.mxu0 0.0
    %106 = vmatpush1.msra.mxu0 %v88
    %107 = vmatprep.subr.mxu0 0.0
    %108 = vmatpush1.msra.mxu0 %v89
    %109 = vmatprep.subr.mxu0 0.0
    %110 = vmatpush1.msra.mxu0 %v90
    %111 = vmatprep.subr.mxu0 0.0
    %112 = vmatpush1.msra.mxu0 %v91
    %113 = vmatprep.subr.mxu0 0.0
    %114 = vmatpush1.msra.mxu0 0.0
    %115 = vmatprep.subr.mxu0 0.0
    %116 = vmatpush1.msra.mxu0 0.0
    %117 = vmatprep.subr.mxu0 0.0
    %118 = vmatpush1.msra.mxu0 0.0
    %119 = vmatprep.subr.mxu0 0.0
    %120 = vmatpush1.msra.mxu0 0.0
    %121 = vmatprep.subr.mxu0 0.0
    %122 = vmatpush1.msra.mxu0 0.0
    %123 = vmatprep.subr.mxu0 0.0
    %124 = vmatpush1.msra.mxu0 0.0
    %125 = vmatprep.subr.mxu0 0.0
    %126 = vmatpush1.msra.mxu0 0.0
    %127 = vmatprep.subr.mxu0 0.0
    %128 = vmatpush1.msra.mxu0 0.0
    %129 = vmatprep.subr.mxu0 0.0
    %130 = vmatpush1.msra.mxu0 0.0
    %131 = vmatprep.subr.mxu0 0.0
    %132 = vmatpush1.msra.mxu0 0.0
    %133 = vmatprep.subr.mxu0 0.0
    %134 = vmatpush1.msra.mxu0 0.0
    %135 = vmatprep.subr.mxu0 0.0
    %136 = vmatpush1.msra.mxu0 0.0
    %137 = vmatprep.subr.mxu0 0.0
    %138 = vmatpush1.msra.mxu0 0.0
    %139 = vmatprep.subr.mxu0 0.0
    %140 = vmatpush1.msra.mxu0 0.0
    %141 = vmatprep.subr.mxu0 0.0
    %142 = vmatpush1.msra.mxu0 0.0
    %143 = vmatprep.subr.mxu0 0.0
    %144 = vmatpush1.msra.mxu0 0.0
    %145 = vmatprep.subr.mxu0 0.0
    %146 = vmatpush1.msra.mxu0 0.0
    %147 = vmatprep.subr.mxu0 0.0
    %148 = vmatpush1.msra.mxu0 0.0
    %149 = vmatprep.subr.mxu0 0.0
    %150 = vmatpush1.msra.mxu0 0.0
    %151 = vmatprep.subr.mxu0 0.0
    %152 = vmatpush1.msra.mxu0 0.0
    %153 = vmatprep.subr.mxu0 0.0
    %154 = vmatpush1.msra.mxu0 0.0
    %155 = vmatprep.subr.mxu0 0.0
    %156 = vmatpush1.msra.mxu0 0.0
    %157 = vmatprep.subr.mxu0 0.0
    %158 = vmatpush1.msra.mxu0 0.0
    %159 = vmatprep.subr.mxu0 0.0
    %160 = vmatpush1.msra.mxu0 0.0
    %161 = vmatprep.subr.mxu0 0.0
    %162 = vmatpush1.msra.mxu0 0.0
    %163 = vmatprep.subr.mxu0 0.0
    %164 = vmatpush1.msra.mxu0 0.0
    %165 = vmatprep.subr.mxu0 0.0
    %166 = vmatpush1.msra.mxu0 0.0
    %167 = vmatprep.subr.mxu0 0.0
    %168 = vmatpush1.msra.mxu0 0.0
    %169 = vmatprep.mubr.f32.mxu0 0.0
    %170 = vmatmul.mubr.f32.gmra.mrb[0].mxu0 %v100
    %v171 = vpop.f32.mrb[0].mxu0
    %v172 = vadd.f32 %v97, %v171
    %v173 = vpop.f32.mrb[0].mxu0
    %174 = vmatprep.mubr.f32.mxu0 0.0
    %175 = vmatmul.mubr.f32.gmra.mrb[0].mxu0 %v103
    %v176 = vpop.f32.mrb[0].mxu0
    %v177 = vadd.f32 %v97, %v176
    %v178 = vpop.f32.mrb[0].mxu0
    %179 = vdwg.mxu0
    %v180 = vmul.f32 %v172, 0.5
    %v181 = vmul.f32 %v177, 0.5
    %v182 = vmul.f32 %v172, 0.70710677
    %v183 = vmul.f32 %v177, 0.70710677
    %v184 = vand.u32 2147483647, %v182
    %v185 = vand.u32 2147483647, %v183
    %v186 = vmul.f32 %v184, 0.3275911
    %v187 = vmul.f32 %v185, 0.3275911
    %v188 = vadd.f32 %v186, 1.0
    %v189 = vadd.f32 %v187, 1.0
    %v190 = vrcp.pop %v188
    %v191 = vmul.f32 1.0, %v190
    %v192 = vrcp.pop %v189
    %v193 = vmul.f32 1.0, %v192
    %v194 = vmul.f32 %v191, 1.0614054
    %v195 = vmul.f32 %v193, 1.0614054
    %v196 = vadd.f32 %v194, -1.4531521
    %v197 = vadd.f32 %v195, -1.4531521
    %v198 = vmul.f32 %v196, %v191
    %v199 = vmul.f32 %v197, %v193
    %v200 = vadd.f32 %v198, 1.4214138
    %v201 = vadd.f32 %v199, 1.4214138
    %v202 = vmul.f32 %v200, %v191
    %v203 = vmul.f32 %v201, %v193
    %v204 = vadd.f32 %v202, -0.28449672
    %v205 = vadd.f32 %v203, -0.28449672
    %v206 = vmul.f32 %v204, %v191
    %v207 = vmul.f32 %v205, %v193
    %v208 = vadd.f32 %v206, 0.2548296
    %v209 = vadd.f32 %v207, 0.2548296
    %v210 = vmul.f32 %v208, %v191
    %v211 = vmul.f32 %v209, %v193
    %v212 = vsub.f32 0.0, %v184
    %v213 = vsub.f32 0.0, %v185
    %v214 = vmul.f32 %v212, %v184
    %v215 = vmul.f32 %v213, %v185
    %v216 = vmul.f32 %v214, 1.442695
    %v217 = vpow.pop %v216
    %v218 = vmul.f32 %v215, 1.442695
    %v219 = vpow.pop %v218
    %v220 = vmul.f32 %v210, %v217
    %v221 = vmul.f32 %v211, %v219
    %v222 = vsub.f32 1.0, %v220
    %v223 = vsub.f32 1.0, %v221
    %vm224 = vcmp.ge.f32.partialorder %v182, 0.0
    %vm225 = vcmp.ge.f32.partialorder %v183, 0.0
    %v226 = vsub.f32 0.0, %v222
    %v227 = vsub.f32 0.0, %v223
    %v228 = vsel %vm224, %v222, %v226
    %v229 = vsel %vm225, %v223, %v227
    %v230 = vadd.f32 %v228, 1.0
    %v231 = vadd.f32 %v229, 1.0
    %v232 = vmul.f32 %v180, %v230
    %v233 = vmul.f32 %v181, %v231
    %v234 = vld [vmem:[%s8] sm:$0xff]
    %v235 = vld [vmem:[%s8 + $0x8] sm:$0xff]
    %v236 = vld [vmem:[%s8 + $0x10] sm:$0xff]
    %v237 = vld [vmem:[%s8 + $0x18] sm:$0xff]
    %v238 = vld [vmem:[%s8 + $0x20] sm:$0xff]
    %v239 = vld [vmem:[%s8 + $0x28] sm:$0xff]
    %v240 = vld [vmem:[%s8 + $0x30] sm:$0xff]
    %v241 = vld [vmem:[%s8 + $0x38] sm:$0xff]
    %v242 = vld [vmem:[%s8 + $0x40] sm:$0xff]
    %v243 = vld [vmem:[%s8 + $0x48] sm:$0xff]
    %v244 = vld [vmem:[%s8 + $0x50] sm:$0xff]
    %v245 = vld [vmem:[%s8 + $0x58] sm:$0xff]
    %v246 = vld [vmem:[%s8 + $0x60] sm:$0xff]
    %v247 = vld [vmem:[%s8 + $0x68] sm:$0xff]
    %v248 = vld [vmem:[%s8 + $0x70] sm:$0xff]
    %v249 = vld [vmem:[%s8 + $0x78] sm:$0xff]
    %v250 = vld [vmem:[%s9] sm:$0x1]
    %v252 = vlaneseq
    %v253 = vshrl.u32 %v252, 7
    %v254 = vsub.s32 0, %v253
    %v255 = vrot.slane %v250, %v254
    %257 = vmatprep.subr.mxu0 0.0
    %258 = vmatpush1.msra.mxu0 %v234
    %259 = vmatprep.subr.mxu0 0.0
    %260 = vmatpush1.msra.mxu0 %v235
    %261 = vmatprep.subr.mxu0 0.0
    %262 = vmatpush1.msra.mxu0 %v236
    %263 = vmatprep.subr.mxu0 0.0
    %264 = vmatpush1.msra.mxu0 %v237
    %265 = vmatprep.subr.mxu0 0.0
    %266 = vmatpush1.msra.mxu0 %v238
    %267 = vmatprep.subr.mxu0 0.0
    %268 = vmatpush1.msra.mxu0 %v239
    %269 = vmatprep.subr.mxu0 0.0
    %270 = vmatpush1.msra.mxu0 %v240
    %271 = vmatprep.subr.mxu0 0.0
    %272 = vmatpush1.msra.mxu0 %v241
    %273 = vmatprep.subr.mxu0 0.0
    %274 = vmatpush1.msra.mxu0 %v242
    %275 = vmatprep.subr.mxu0 0.0
    %276 = vmatpush1.msra.mxu0 %v243
    %277 = vmatprep.subr.mxu0 0.0
    %278 = vmatpush1.msra.mxu0 %v244
    %279 = vmatprep.subr.mxu0 0.0
    %280 = vmatpush1.msra.mxu0 %v245
    %281 = vmatprep.subr.mxu0 0.0
    %282 = vmatpush1.msra.mxu0 %v246
    %283 = vmatprep.subr.mxu0 0.0
    %284 = vmatpush1.msra.mxu0 %v247
    %285 = vmatprep.subr.mxu0 0.0
    %286 = vmatpush1.msra.mxu0 %v248
    %287 = vmatprep.subr.mxu0 0.0
    %288 = vmatpush1.msra.mxu0 %v249
    %289 = vmatprep.subr.mxu0 0.0
    %290 = vmatpush1.msra.mxu0 0.0
    %291 = vmatprep.subr.mxu0 0.0
    %292 = vmatpush1.msra.mxu0 0.0
    %293 = vmatprep.subr.mxu0 0.0
    %294 = vmatpush1.msra.mxu0 0.0
    %295 = vmatprep.subr.mxu0 0.0
    %296 = vmatpush1.msra.mxu0 0.0
    %297 = vmatprep.subr.mxu0 0.0
    %298 = vmatpush1.msra.mxu0 0.0
    %299 = vmatprep.subr.mxu0 0.0
    %300 = vmatpush1.msra.mxu0 0.0
    %301 = vmatprep.subr.mxu0 0.0
    %302 = vmatpush1.msra.mxu0 0.0
    %303 = vmatprep.subr.mxu0 0.0
    %304 = vmatpush1.msra.mxu0 0.0
    %305 = vmatprep.subr.mxu0 0.0
    %306 = vmatpush1.msra.mxu0 0.0
    %307 = vmatprep.subr.mxu0 0.0
    %308 = vmatpush1.msra.mxu0 0.0
    %309 = vmatprep.subr.mxu0 0.0
    %310 = vmatpush1.msra.mxu0 0.0
    %311 = vmatprep.subr.mxu0 0.0
    %312 = vmatpush1.msra.mxu0 0.0
    %313 = vmatprep.subr.mxu0 0.0
    %314 = vmatpush1.msra.mxu0 0.0
    %315 = vmatprep.subr.mxu0 0.0
    %316 = vmatpush1.msra.mxu0 0.0
    %317 = vmatprep.subr.mxu0 0.0
    %318 = vmatpush1.msra.mxu0 0.0
    %319 = vmatprep.subr.mxu0 0.0
    %320 = vmatpush1.msra.mxu0 0.0
    %321 = vmatprep.mubr.f32.mxu0 0.0
    %322 = vmatmul.mubr.f32.gmra.mrb[0].mxu0 %v232
    %v323 = vpop.f32.mrb[0].mxu0
    %v324 = vadd.f32 %v255, %v323
    %v325 = vpop.f32.mrb[0].mxu0
    %326 = vmatprep.mubr.f32.mxu0 0.0
    %327 = vmatmul.mubr.f32.gmra.mrb[0].mxu0 %v233
    %v328 = vpop.f32.mrb[0].mxu0
    %v329 = vadd.f32 %v255, %v328
    %v330 = vpop.f32.mrb[0].mxu0
    %331 = vdwg.mxu0
    %v332 = vadd.f32 %v86, %v324
    %v333 = vadd.f32 %v87, %v329
    %v334 = vld [vmem:[%s4] sm:$0x1]
    %v335 = vld [vmem:[%s5] sm:$0x1]
    %v336 = vsel %vm44, %v332, 0.0
    %337 = vadd.xlane.f32.xlu0 %v336
    %v338 = vpop.xlane.xlu0 %337
    %v339 = vsel %vm44, %v333, 0.0
    %340 = vadd.xlane.f32.xlu0 %v339
    %v341 = vpop.xlane.xlu0 %340
    %v342 = vmul.f32 %v338, %v51
    %v343 = vmul.f32 %v341, %v51
    %v344 = vsub.f32 %v332, %v342
    %v345 = vsub.f32 %v333, %v343
    %v346 = vmul.f32 %v344, %v344
    %v347 = vmul.f32 %v345, %v345
    %v348 = vsel %vm44, %v346, 0.0
    %349 = vadd.xlane.f32.xlu0 %v348
    %v350 = vpop.xlane.xlu0 %349
    %v351 = vsel %vm44, %v347, 0.0
    %352 = vadd.xlane.f32.xlu0 %v351
    %v353 = vpop.xlane.xlu0 %352
    %v354 = vmul.f32 %v350, %v51
    %v355 = vmul.f32 %v353, %v51
    %v356 = vadd.f32 %v354, 1e-05
    %v357 = vadd.f32 %v355, 1e-05
    %v358 = vrsqrt.pop %v356
    %v359 = vrsqrt.pop %v357
    %v360 = vmul.f32 %v344, %v358
    %v361 = vmul.f32 %v345, %v359
    %v363 = vlaneseq
    %v364 = vshrl.u32 %v363, 7
    %v365 = vsub.s32 0, %v364
    %v366 = vrot.slane %v334, %v365
    %v368 = vmul.f32 %v360, %v366
    %v369 = vmul.f32 %v361, %v366
    %v371 = vlaneseq
    %v372 = vshrl.u32 %v371, 7
    %v373 = vsub.s32 0, %v372
    %v374 = vrot.slane %v335, %v373
    %v376 = vadd.f32 %v368, %v374
    %v377 = vadd.f32 %v369, %v374
    %378 = vst.msk [vmem:[#allocation2] sm:$0xff] %vm44, %v376
    %379 = vst.msk [vmem:[#allocation2 + $0x8] sm:$0xff] %vm44, %v377
    // Predicated region
    $region42: #{ffn_pseudoformer.1} parent=1 // pred_check
      _
    $region43: #{ffn_pseudoformer.1} parent=1 // pred_check_branch
      %381 = sbr.rel (0) target = $region45
    $region44: #{ffn_pseudoformer.1} parent=1 // pred_region
      %s383 = ssub.s32 256, 256
      %384 = vsyncadd [#allocation3], %s383
      %s385 = sshll.u32 [#allocation2], 4
      %s386 = int_to_ptr.vmem [resolvable:$true] %s385
      %391 = dma.vmem_to_hbm [thread:$0]  %s386, 256, %s10, [#allocation3], 128, 128, 8
    $region45: #{ffn_pseudoformer.1} parent=1 // pred_fallthru
      _
    // Predicated region
    $region46: #{ffn_pseudoformer.1} parent=1 // pred_check
      _
    $region47: #{ffn_pseudoformer.1} parent=1 // pred_check_branch
      %393 = sbr.rel (0) target = $region49
    $region48: #{ffn_pseudoformer.1} parent=1 // pred_region
      %394 = dma.done [#allocation3], 256
    $region49: #{ffn_pseudoformer.1} parent=1 // pred_fallthru
      _
    %395 = vsyncpa [#allocation3], 1

</llo_original>
